<compile_context>
chip_gen: v5e
topology: v5e:2x2
jax: 0.10.0
libtpu: 0.0.40
codegen_flags: <defaults>
</compile_context>

<pallas_src>
import jax
import jax.numpy as jnp
from jax.experimental import pallas as pl
from jax.experimental.pallas import tpu as pltpu


def _policy_kernel(x_ref, w1_ref, b1_ref, w2_ref, b2_ref, out_ref):
    # x_ref  : [TB, S]      batch tile of states
    # w1_ref : [S, H]       first-layer weights (constant index_map -> VMEM resident)
    # b1_ref : [1, H]       first-layer bias
    # w2_ref : [H, A_pad]   second-layer weights, action dim zero-padded to 128 lanes
    # b2_ref : [1, A_pad]   second-layer bias, pads filled with -1e30 (exp() -> ~0)
    # out_ref: [TB, A_pad]  lane-dense output tile (wrapper slices [:, :A])
    x = x_ref[...]

    # hidden = relu(x @ W1 + b1)
    h = jnp.dot(x, w1_ref[...], preferred_element_type=jnp.float32) + b1_ref[...]
    h = jnp.maximum(h, 0.0)                                   # [TB, H]

    # logits = h @ W2 + b2  (padded action columns end up ~-1e30)
    logits = jnp.dot(h, w2_ref[...], preferred_element_type=jnp.float32) + b2_ref[...]

    # numerically-stable softmax over the (padded, lane-dense) action axis
    m = jnp.max(logits, axis=-1, keepdims=True)
    e = jnp.exp(logits - m)
    denom = jnp.sum(e, axis=-1, keepdims=True)
    r = pl.reciprocal(denom, approx=True)                     # EUP slot
    r = r * (2.0 - denom * r)                                 # one Newton step -> ~1e-7 rel err
    out_ref[...] = (e * r).astype(out_ref.dtype)


def policy_forward(x, w1, b1, w2, b2, *, block_b=None):
    """Fused policy forward. x: [B, S] -> action probabilities [B, A]."""
    B, S = x.shape
    H = w1.shape[1]
    A = w2.shape[1]

    # --- lane-dense output: pad the action dim to a multiple of 128 lanes ---
    # W2 pads with zeros; b2 pads with a large *finite* negative (never -inf,
    # so max-subtract can't produce inf-inf NaNs). Padded probs are ~0 and are
    # sliced off before returning.
    A_pad = max(128, -(-A // 128) * 128)
    if A_pad != A:
        w2 = jnp.pad(w2, ((0, 0), (0, A_pad - A)))
        b2 = jnp.pad(b2, ((0, 0), (0, A_pad - A)), constant_values=-1e30)

    # --- batch tiling: large tiles amortize per-grid-step overhead; keep >=2
    # blocks for large batches so v7x's two TensorCores each get one. ---
    if block_b is None:
        if B >= 512:
            half = -(-B // 2)                 # ceil(B/2)
            block_b = -(-half // 8) * 8       # round up to sublane multiple
        else:
            block_b = -(-B // 8) * 8          # single block
    block_b = max(8, int(block_b))

    # x is passed directly (no [x|1] concat). Pad the batch only if needed;
    # padded rows produce harmless finite probabilities and are sliced off.
    pad = (-B) % block_b
    if pad:
        x = jnp.pad(x, ((0, pad), (0, 0)))
    Bp = B + pad

    # Explicit VMEM budget: double-buffered x/out tiles + (double-buffered)
    # parameter tiles, with generous headroom. Capped at 32 MiB so the same
    # sizing is valid on v7x (64 MiB physical / 32 MiB scoped) as on v5e/v6e.
    tile_bytes = 4 * (2 * block_b * (S + A_pad)
                      + 2 * (S * H + H + H * A_pad + A_pad))
    vmem_limit = int(min(32 * 1024 * 1024, max(4 * tile_bytes, 8 * 1024 * 1024)))

    out = pl.pallas_call(
        _policy_kernel,
        out_shape=jax.ShapeDtypeStruct((Bp, A_pad), jnp.float32),
        grid_spec=pltpu.PrefetchScalarGridSpec(
            num_scalar_prefetch=0,
            grid=(Bp // block_b,),
            in_specs=[
                # batch-tiled activations (S is full extent -> legal skinny dim)
                pl.BlockSpec((block_b, S), lambda i: (i, 0)),
                # parameters: constant index_map -> stay VMEM-resident across steps
                # (pl.Buffered(1) hygiene intentionally skipped; params total < 70 KiB)
                pl.BlockSpec((S, H), lambda i: (0, 0)),
                pl.BlockSpec((1, H), lambda i: (0, 0)),
                pl.BlockSpec((H, A_pad), lambda i: (0, 0)),
                pl.BlockSpec((1, A_pad), lambda i: (0, 0)),
            ],
            out_specs=pl.BlockSpec((block_b, A_pad), lambda i: (i, 0)),
        ),
        compiler_params=pltpu.CompilerParams(
            # batch axis is independent -> shard blocks across both TCs on v7x
            dimension_semantics=("parallel",),
            vmem_limit_bytes=vmem_limit),
    )(x, w1, b1, w2, b2)
    return out[:B, :A]


def init_params(key, state_dim, hidden_size, n_actions):
    """Deterministic synthetic parameter init (matches nn.Linear shapes)."""
    k1, k2, k3, k4 = jax.random.split(key, 4)
    w1 = jax.random.uniform(k1, (state_dim, hidden_size), jnp.float32,
                            -1.0, 1.0) / jnp.sqrt(state_dim)
    b1 = jax.random.uniform(k2, (1, hidden_size), jnp.float32,
                            -1.0, 1.0) / jnp.sqrt(state_dim)
    w2 = jax.random.uniform(k3, (hidden_size, n_actions), jnp.float32,
                            -1.0, 1.0) / jnp.sqrt(hidden_size)
    b2 = jax.random.uniform(k4, (1, n_actions), jnp.float32,
                            -1.0, 1.0) / jnp.sqrt(hidden_size)
    return w1, b1, w2, b2


if __name__ == "__main__":
    # CartPole-like setup: 4-dim observation, 2 discrete actions, hidden=128
    # (module default). A batch of states makes the kernel non-trivial and
    # exercises the 2-block "parallel" grid.
    B, STATE_DIM, HIDDEN, N_ACTIONS = 512, 4, 128, 2

    key = jax.random.PRNGKey(0)
    kx, kp = jax.random.split(key)
    x = jax.random.normal(kx, (B, STATE_DIM), dtype=jnp.float32)
    w1, b1, w2, b2 = init_params(kp, STATE_DIM, HIDDEN, N_ACTIONS)

    probs = policy_forward(x, w1, b1, w2, b2)
    probs = jax.block_until_ready(probs)

    # Sanity checks against a pure-JAX reference.
    h_ref = jnp.maximum(x @ w1 + b1, 0.0)
    logits_ref = h_ref @ w2 + b2
    probs_ref = jax.nn.softmax(logits_ref, axis=-1)
    assert probs.shape == (B, N_ACTIONS)
    assert jnp.allclose(jnp.sum(probs, axis=-1), 1.0, atol=1e-5)
    assert jnp.allclose(probs, probs_ref, atol=1e-5)

    print("KERNEL_OK")
</pallas_src>

<mosaic_0001>
module attributes {stable_mosaic.version = 11 : i64} {
  func.func @_policy_kernel(%arg0: i32, %arg1: memref<256x4xf32, #tpu.memory_space<vmem>>, %arg2: memref<4x128xf32, #tpu.memory_space<vmem>>, %arg3: memref<1x128xf32, #tpu.memory_space<vmem>>, %arg4: memref<128x128xf32, #tpu.memory_space<vmem>>, %arg5: memref<1x128xf32, #tpu.memory_space<vmem>>, %arg6: memref<256x128xf32, #tpu.memory_space<vmem>>) attributes {dimension_semantics = [#tpu.dimension_semantics<parallel>], iteration_bounds = array<i64: 2>, scalar_prefetch = 0 : i64, scratch_operands = 0 : i64, tpu.core_type = #tpu.core_type<tc>, window_params = [{transform_indices = @transform_0, window_bounds = array<i64: 256, 4>}, {pipeline_mode = #tpu.pipeline_mode<synchronous>, transform_indices = @transform_1, window_bounds = array<i64: 4, 128>}, {pipeline_mode = #tpu.pipeline_mode<synchronous>, transform_indices = @transform_2, window_bounds = array<i64: 1, 128>}, {pipeline_mode = #tpu.pipeline_mode<synchronous>, transform_indices = @transform_3, window_bounds = array<i64: 128, 128>}, {pipeline_mode = #tpu.pipeline_mode<synchronous>, transform_indices = @transform_4, window_bounds = array<i64: 1, 128>}, {transform_indices = @transform_5, window_bounds = array<i64: 256, 128>}]} {
    %c0 = arith.constant 0 : index
    %c0_0 = arith.constant 0 : index
    %0 = vector.load %arg1[%c0, %c0_0] : memref<256x4xf32, #tpu.memory_space<vmem>>, vector<256x4xf32>
    %c0_1 = arith.constant 0 : index
    %c0_2 = arith.constant 0 : index
    %1 = vector.load %arg2[%c0_1, %c0_2] : memref<4x128xf32, #tpu.memory_space<vmem>>, vector<4x128xf32>
    %cst = arith.constant dense<0.000000e+00> : vector<256x128xf32>
    %2 = tpu.matmul %0, %1, %cst {dimension_numbers = #tpu.dot_dimension_numbers<[1], [0], [0], [1], [0, 0, 1, 1], [], []>} : vector<256x4xf32>, vector<4x128xf32>, vector<256x128xf32> -> vector<256x128xf32>
    %c0_3 = arith.constant 0 : index
    %c0_4 = arith.constant 0 : index
    %3 = vector.load %arg3[%c0_3, %c0_4] : memref<1x128xf32, #tpu.memory_space<vmem>>, vector<1x128xf32>
    %4 = vector.broadcast %3 : vector<1x128xf32> to vector<256x128xf32>
    %5 = arith.addf %2, %4 : vector<256x128xf32>
    %cst_5 = arith.constant 0.000000e+00 : f32
    %6 = vector.broadcast %cst_5 : f32 to vector<256x128xf32>
    %7 = arith.maximumf %5, %6 : vector<256x128xf32>
    %c0_6 = arith.constant 0 : index
    %c0_7 = arith.constant 0 : index
    %8 = vector.load %arg4[%c0_6, %c0_7] : memref<128x128xf32, #tpu.memory_space<vmem>>, vector<128x128xf32>
    %cst_8 = arith.constant dense<0.000000e+00> : vector<256x128xf32>
    %9 = tpu.matmul %7, %8, %cst_8 {dimension_numbers = #tpu.dot_dimension_numbers<[1], [0], [0], [1], [0, 0, 1, 1], [], []>} : vector<256x128xf32>, vector<128x128xf32>, vector<256x128xf32> -> vector<256x128xf32>
    %c0_9 = arith.constant 0 : index
    %c0_10 = arith.constant 0 : index
    %10 = vector.load %arg5[%c0_9, %c0_10] : memref<1x128xf32, #tpu.memory_space<vmem>>, vector<1x128xf32>
    %11 = vector.broadcast %10 : vector<1x128xf32> to vector<256x128xf32>
    %12 = arith.addf %9, %11 : vector<256x128xf32>
    %cst_11 = arith.constant dense<0xFF800000> : vector<256xf32>
    %13 = vector.multi_reduction <maximumf>, %12, %cst_11 [1] : vector<256x128xf32> to vector<256xf32>
    %14 = vector.shape_cast %13 : vector<256xf32> to vector<256x1xf32>
    %15 = vector.broadcast %14 : vector<256x1xf32> to vector<256x128xf32>
    %16 = arith.subf %12, %15 : vector<256x128xf32>
    %17 = math.exp %16 : vector<256x128xf32>
    %cst_12 = arith.constant dense<0.000000e+00> : vector<256xf32>
    %18 = vector.multi_reduction <add>, %17, %cst_12 [1] : vector<256x128xf32> to vector<256xf32>
    %19 = vector.shape_cast %18 : vector<256xf32> to vector<256x1xf32>
    %20 = tpu.reciprocal %19 {approx = true} : vector<256x1xf32> -> vector<256x1xf32>
    %21 = arith.mulf %19, %20 : vector<256x1xf32>
    %cst_13 = arith.constant 2.000000e+00 : f32
    %22 = vector.broadcast %cst_13 : f32 to vector<256x1xf32>
    %23 = arith.subf %22, %21 : vector<256x1xf32>
    %24 = arith.mulf %20, %23 : vector<256x1xf32>
    %25 = vector.broadcast %24 : vector<256x1xf32> to vector<256x128xf32>
    %26 = arith.mulf %17, %25 : vector<256x128xf32>
    %c0_14 = arith.constant 0 : index
    %c0_15 = arith.constant 0 : index
    %27 = vector.load %arg6[%c0_14, %c0_15] : memref<256x128xf32, #tpu.memory_space<vmem>>, vector<256x128xf32>
    tpu.vector_store %arg6[%c0_14, %c0_15], %26 {strides = array<i32>} : memref<256x128xf32, #tpu.memory_space<vmem>>, vector<256x128xf32>,
    return
  }
  func.func @transform_0(%arg0: i32) -> (i32, i32) {
    %c0_i32 = arith.constant 0 : i32
    %c0_i32_0 = arith.constant 0 : i32
    return %arg0, %c0_i32 : i32, i32
  }
  func.func @transform_1(%arg0: i32) -> (i32, i32) {
    %c0_i32 = arith.constant 0 : i32
    %c0_i32_0 = arith.constant 0 : i32
    %c0_i32_1 = arith.constant 0 : i32
    return %c0_i32, %c0_i32_0 : i32, i32
  }
  func.func @transform_2(%arg0: i32) -> (i32, i32) {
    %c0_i32 = arith.constant 0 : i32
    %c0_i32_0 = arith.constant 0 : i32
    %c0_i32_1 = arith.constant 0 : i32
    return %c0_i32, %c0_i32_0 : i32, i32
  }
  func.func @transform_3(%arg0: i32) -> (i32, i32) {
    %c0_i32 = arith.constant 0 : i32
    %c0_i32_0 = arith.constant 0 : i32
    %c0_i32_1 = arith.constant 0 : i32
    return %c0_i32, %c0_i32_0 : i32, i32
  }
  func.func @transform_4(%arg0: i32) -> (i32, i32) {
    %c0_i32 = arith.constant 0 : i32
    %c0_i32_0 = arith.constant 0 : i32
    %c0_i32_1 = arith.constant 0 : i32
    return %c0_i32, %c0_i32_0 : i32, i32
  }
  func.func @transform_5(%arg0: i32) -> (i32, i32) {
    %c0_i32 = arith.constant 0 : i32
    %c0_i32_0 = arith.constant 0 : i32
    return %arg0, %c0_i32 : i32, i32
  }
}

</mosaic_0001>

<llo_original>
// kernel: tpu_custom_call.1
$region0: #{tpu_custom_call.1}
  #allocation0 [shape = 'u32[]', space=smem, size = 0x4, offset = 0x4, fixed_abs, tag = 'smem constant byte address 0x4 - core index']
  #allocation1 [shape = 'u32[72,128]{1,0:T(1,128)}', space=vmem, size = 0x9000, scoped, tag = 'internal scratch']
  %s0 = inlined_call_operand.vmem [shape: f32[512,4], index: 0, kind: input, shape index: {}]
  %s1 = inlined_call_operand.vmem [shape: f32[4,128], index: 1, kind: input, shape index: {}]
  %s2 = inlined_call_operand.vmem [shape: f32[1,128], index: 2, kind: input, shape index: {}]
  %s3 = inlined_call_operand.vmem [shape: f32[128,128], index: 3, kind: input, shape index: {}]
  %s4 = inlined_call_operand.vmem [shape: f32[1,128], index: 4, kind: input, shape index: {}]
  %s5 = inlined_call_operand.hbm [shape: f32[512,128], index: 5, kind: output, shape index: {}]
  %s6 = sld [smem:[#allocation0]]
  $region53: #{tpu_custom_call.1} parent=0
    _
  %s8 = ssub.s32 1, %s6
  %s9 = scalar_select 0, %s8, %s6
  $region1: #{tpu_custom_call.1} parent=0
    #allocation2 [shape = 'u8[262144]{0}', space=vmem, size = 0x40000, scoped, tag = 'output window, operand 0']
    #allocation3 [shape = 's32[2]{0}', space=sflag, size = 0x8, scoped, tag = 'scoped memory for tpu_custom_call.1']
    %10 = vsyncpa [#allocation3], 0
    %s11 = scalar_lea.sflag [#allocation3], 1
    %12 = vsyncpa %s11, 0
    loop: start=0, step=1, limit=4
    $region2: #{tpu_custom_call.1} parent=1 // loop_pre_header
      _
    $region3: #{tpu_custom_call.1} parent=1 // loop_header
      %s14 = sphi 0, %s18
      %p15 = scmp.ge.s32.totalorder %s14, 4
      %s24 = sphi 0, %s26
      %s27 = sphi 0, %s24
      %s28 = sphi 0, %s27
      %s44 = sphi 0, %s28
      %s48 = sphi 0, %s48
      %s50 = sphi 0, %s48
      %s51 = sphi 0, %s50
      %s65 = sphi 0, %s51
      %s69 = sphi 0, %s69
      %s71 = sphi 0, %s69
      %s72 = sphi 0, %s71
      %s86 = sphi 0, %s72
      %s90 = sphi 0, %s90
      %s92 = sphi 0, %s90
      %s93 = sphi 0, %s92
      %s107 = sphi 0, %s93
      %s111 = sphi 0, %s111
      %s113 = sphi 0, %s111
      %s114 = sphi 0, %s113
      %s128 = sphi 0, %s114
      %s134 = sphi 0, %s136
      %s137 = sphi 0, %s134
      %s138 = sphi 0, %s137
      %s154 = sphi 0, %s138
    $region4: #{tpu_custom_call.1} parent=1 // loop_header_branch
      %17 = sbr.rel (%p15) target = $region8
    $region5: #{tpu_custom_call.1} parent=1 // loop_body
      %s19 = ssub.s32 %s14, 1
      %s20 = ssub.s32 %s14, 2
      %s21 = sadd.s32 %s14, 1
      %s22 = ssub.s32 %s14, %s21
      %p23 = scmp.eq.s32.totalorder %s22, 0
      %s25 = sadd.s32 %s24, 1
      %s26 = scalar_select %p23, %s24, %s25
      %p29 = pneg %p23
      %p30 = scmp.eq.s32.totalorder %s14, 1
      %p31 = por %p29, %p30
      %p32 = scmp.ne.s32.totalorder %s24, %s27
      %p33 = scmp.eq.s32.totalorder %s14, 0
      %p34 = por %p32, %p33
      %p35 = scmp.ne.s32.totalorder %s24, %s27
      %p36 = scmp.eq.s32.totalorder %s19, 1
      %p37 = por %p35, %p36
      %p38 = scmp.ne.s32.totalorder %s27, %s28
      %p39 = scmp.eq.s32.totalorder %s19, 0
      %p40 = por %p38, %p39
      %p41 = scmp.ne.s32.totalorder %s27, %s28
      %p42 = scmp.eq.s32.totalorder %s20, 1
      %p43 = por %p41, %p42
      %p45 = scmp.ne.s32.totalorder %s28, %s44
      %p46 = scmp.eq.s32.totalorder %s20, 0
      %p47 = por %p45, %p46
      %s49 = sadd.s32 %s48, 1
      %p52 = scmp.eq.s32.totalorder %s14, 1
      %p53 = scmp.ne.s32.totalorder %s48, %s50
      %p54 = scmp.eq.s32.totalorder %s14, 0
      %p55 = por %p53, %p54
      %p56 = scmp.ne.s32.totalorder %s48, %s50
      %p57 = scmp.eq.s32.totalorder %s19, 1
      %p58 = por %p56, %p57
      %p59 = scmp.ne.s32.totalorder %s50, %s51
      %p60 = scmp.eq.s32.totalorder %s19, 0
      %p61 = por %p59, %p60
      %p62 = scmp.ne.s32.totalorder %s50, %s51
      %p63 = scmp.eq.s32.totalorder %s20, 1
      %p64 = por %p62, %p63
      %p66 = scmp.ne.s32.totalorder %s51, %s65
      %p67 = scmp.eq.s32.totalorder %s20, 0
      %p68 = por %p66, %p67
      %s70 = sadd.s32 %s69, 1
      %p73 = scmp.eq.s32.totalorder %s14, 1
      %p74 = scmp.ne.s32.totalorder %s69, %s71
      %p75 = scmp.eq.s32.totalorder %s14, 0
      %p76 = por %p74, %p75
      %p77 = scmp.ne.s32.totalorder %s69, %s71
      %p78 = scmp.eq.s32.totalorder %s19, 1
      %p79 = por %p77, %p78
      %p80 = scmp.ne.s32.totalorder %s71, %s72
      %p81 = scmp.eq.s32.totalorder %s19, 0
      %p82 = por %p80, %p81
      %p83 = scmp.ne.s32.totalorder %s71, %s72
      %p84 = scmp.eq.s32.totalorder %s20, 1
      %p85 = por %p83, %p84
      %p87 = scmp.ne.s32.totalorder %s72, %s86
      %p88 = scmp.eq.s32.totalorder %s20, 0
      %p89 = por %p87, %p88
      %s91 = sadd.s32 %s90, 1
      %p94 = scmp.eq.s32.totalorder %s14, 1
      %p95 = scmp.ne.s32.totalorder %s90, %s92
      %p96 = scmp.eq.s32.totalorder %s14, 0
      %p97 = por %p95, %p96
      %p98 = scmp.ne.s32.totalorder %s90, %s92
      %p99 = scmp.eq.s32.totalorder %s19, 1
      %p100 = por %p98, %p99
      %p101 = scmp.ne.s32.totalorder %s92, %s93
      %p102 = scmp.eq.s32.totalorder %s19, 0
      %p103 = por %p101, %p102
      %p104 = scmp.ne.s32.totalorder %s92, %s93
      %p105 = scmp.eq.s32.totalorder %s20, 1
      %p106 = por %p104, %p105
      %p108 = scmp.ne.s32.totalorder %s93, %s107
      %p109 = scmp.eq.s32.totalorder %s20, 0
      %p110 = por %p108, %p109
      %s112 = sadd.s32 %s111, 1
      %p115 = scmp.eq.s32.totalorder %s14, 1
      %p116 = scmp.ne.s32.totalorder %s111, %s113
      %p117 = scmp.eq.s32.totalorder %s14, 0
      %p118 = por %p116, %p117
      %p119 = scmp.ne.s32.totalorder %s111, %s113
      %p120 = scmp.eq.s32.totalorder %s19, 1
      %p121 = por %p119, %p120
      %p122 = scmp.ne.s32.totalorder %s113, %s114
      %p123 = scmp.eq.s32.totalorder %s19, 0
      %p124 = por %p122, %p123
      %p125 = scmp.ne.s32.totalorder %s113, %s114
      %p126 = scmp.eq.s32.totalorder %s20, 1
      %p127 = por %p125, %p126
      %p129 = scmp.ne.s32.totalorder %s114, %s128
      %p130 = scmp.eq.s32.totalorder %s20, 0
      %p131 = por %p129, %p130
      %s132 = ssub.s32 %s14, %s21
      %p133 = scmp.eq.s32.totalorder %s132, 0
      %s135 = sadd.s32 %s134, 1
      %s136 = scalar_select %p133, %s134, %s135
      %p139 = pneg %p133
      %p140 = scmp.eq.s32.totalorder %s14, 1
      %p141 = por %p139, %p140
      %p142 = scmp.ne.s32.totalorder %s134, %s137
      %p143 = scmp.eq.s32.totalorder %s14, 0
      %p144 = por %p142, %p143
      %p145 = scmp.ne.s32.totalorder %s134, %s137
      %p146 = scmp.eq.s32.totalorder %s19, 1
      %p147 = por %p145, %p146
      %p148 = scmp.ne.s32.totalorder %s137, %s138
      %p149 = scmp.eq.s32.totalorder %s19, 0
      %p150 = por %p148, %p149
      %p151 = scmp.ne.s32.totalorder %s137, %s138
      %p152 = scmp.eq.s32.totalorder %s20, 1
      %p153 = por %p151, %p152
      %p155 = scmp.ne.s32.totalorder %s138, %s154
      %p156 = scmp.eq.s32.totalorder %s20, 0
      %p157 = por %p155, %p156
      %p158 = scmp.le.s32.totalorder 1, %s14
      %p159 = scmp.lt.s32.totalorder %s14, 3
      %p160 = pnand %p158, %p159
      %p161 = pneg %p160
      // Predicated region
      $region9: #{tpu_custom_call.1} parent=5 // pred_check
        _
      $region10: #{tpu_custom_call.1} parent=5 // pred_check_branch
        %163 = sbr.rel (%p160) target = $region12
      $region11: #{tpu_custom_call.1} parent=5 // pred_region
        %s164 = ssub.s32 %s14, 1
        // Predicated region
        $region13: #{tpu_custom_call.1} parent=11 // pred_check
          %p165 = pneg %p61
        $region14: #{tpu_custom_call.1} parent=11 // pred_check_branch
          %167 = sbr.rel (%p165) target = $region16
        $region15: #{tpu_custom_call.1} parent=11 // pred_region
          _
        $region16: #{tpu_custom_call.1} parent=11 // pred_fallthru
          _
        // Predicated region
        $region17: #{tpu_custom_call.1} parent=11 // pred_check
          %p168 = pneg %p82
        $region18: #{tpu_custom_call.1} parent=11 // pred_check_branch
          %170 = sbr.rel (%p168) target = $region20
        $region19: #{tpu_custom_call.1} parent=11 // pred_region
          _
        $region20: #{tpu_custom_call.1} parent=11 // pred_fallthru
          _
        // Predicated region
        $region21: #{tpu_custom_call.1} parent=11 // pred_check
          %p171 = pneg %p103
        $region22: #{tpu_custom_call.1} parent=11 // pred_check_branch
          %173 = sbr.rel (%p171) target = $region24
        $region23: #{tpu_custom_call.1} parent=11 // pred_region
          _
        $region24: #{tpu_custom_call.1} parent=11 // pred_fallthru
          _
        // Predicated region
        $region25: #{tpu_custom_call.1} parent=11 // pred_check
          %p174 = pneg %p124
        $region26: #{tpu_custom_call.1} parent=11 // pred_check_branch
          %176 = sbr.rel (%p174) target = $region28
        $region27: #{tpu_custom_call.1} parent=11 // pred_region
          _
        $region28: #{tpu_custom_call.1} parent=11 // pred_fallthru
          _
      $region12: #{tpu_custom_call.1} parent=5 // pred_fallthru
        _
      %p177 = scmp.lt.s32.totalorder %s14, 2
      // Predicated region
      $region29: #{tpu_custom_call.1} parent=5 // pred_check
        %p178 = pneg %p177
      $region30: #{tpu_custom_call.1} parent=5 // pred_check_branch
        %180 = sbr.rel (%p178) target = $region32
      $region31: #{tpu_custom_call.1} parent=5 // pred_region
        // Predicated region
        $region33: #{tpu_custom_call.1} parent=31 // pred_check
          %p181 = pneg %p34
        $region34: #{tpu_custom_call.1} parent=31 // pred_check_branch
          %183 = sbr.rel (%p181) target = $region36
        $region35: #{tpu_custom_call.1} parent=31 // pred_region
          %s184 = smul.u32 32, %s14
          %p185 = scmp.lt.s32.totalorder %s184, 63
          %s186 = scalar_select %p185, %s184, 63
          %s187 = smul.addr %s186, 8
          %s188 = scalar_lea.vmem %s0, %s187
          %s189 = smul.u32 32, %s14
        $region36: #{tpu_custom_call.1} parent=31 // pred_fallthru
          _
      $region32: #{tpu_custom_call.1} parent=5 // pred_fallthru
        _
      %p190 = scmp.le.s32.totalorder 1, %s14
      %p191 = scmp.lt.s32.totalorder %s14, 3
      %p192 = pnand %p190, %p191
      %p193 = pneg %p192
      // Predicated region
      $region37: #{tpu_custom_call.1} parent=5 // pred_check
        _
      $region38: #{tpu_custom_call.1} parent=5 // pred_check_branch
        %195 = sbr.rel (%p192) target = $region40
      $region39: #{tpu_custom_call.1} parent=5 // pred_region
        %s196 = ssub.s32 %s14, 1
        %s197 = smul.u32 32, %s19
        %p198 = scmp.lt.s32.totalorder %s197, 63
        %s199 = scalar_select %p198, %s197, 63
        %s200 = smul.addr %s199, 8
        %s201 = scalar_lea.vmem %s0, %s200
        %p202 = pneg %p40
        %p203 = pneg %p37
        %p204 = pneg %p61
        %p205 = pneg %p58
        %p206 = pneg %p82
        %p207 = pneg %p79
        %p208 = pneg %p103
        %p209 = pneg %p100
        %p210 = pneg %p124
        %p211 = pneg %p121
        %p212 = pneg %p150
        %p213 = pneg %p147
        %s214 = sand.u32 %s137, 1
        %s215 = scalar_lea.sflag [#allocation3], %s214
        %s216 = sand.u32 %s137, 1
        %s217 = smul.addr %s216, 256
        %s218 = scalar_lea.vmem [#allocation2], %s217
        %s219 = smul.u32 32, %s19
        %p220 = scmp.lt.s32.totalorder %s219, 63
        %s221 = scalar_select %p220, %s219, 63
        %s222 = smul.addr %s221, 8
        %s223 = scalar_lea.vmem %s0, %s222
        %s224 = smul.u32 32, %s19
        %s225 = smul.u32 32, %s19
        %v226 = vld [vmem:[%s223] sm:$0xff]
        %v227 = vld [vmem:[%s223 + $0x8] sm:$0xff]
        %v228 = vld [vmem:[%s223 + $0x10] sm:$0xff]
        %v229 = vld [vmem:[%s223 + $0x18] sm:$0xff]
        %v230 = vld [vmem:[%s223 + $0x20] sm:$0xff]
        %v231 = vld [vmem:[%s223 + $0x28] sm:$0xff]
        %v232 = vld [vmem:[%s223 + $0x30] sm:$0xff]
        %v233 = vld [vmem:[%s223 + $0x38] sm:$0xff]
        %v234 = vld [vmem:[%s223 + $0x40] sm:$0xff]
        %v235 = vld [vmem:[%s223 + $0x48] sm:$0xff]
        %v236 = vld [vmem:[%s223 + $0x50] sm:$0xff]
        %v237 = vld [vmem:[%s223 + $0x58] sm:$0xff]
        %v238 = vld [vmem:[%s223 + $0x60] sm:$0xff]
        %v239 = vld [vmem:[%s223 + $0x68] sm:$0xff]
        %v240 = vld [vmem:[%s223 + $0x70] sm:$0xff]
        %v241 = vld [vmem:[%s223 + $0x78] sm:$0xff]
        %v242 = vld [vmem:[%s223 + $0x80] sm:$0xff]
        %v243 = vld [vmem:[%s223 + $0x88] sm:$0xff]
        %v244 = vld [vmem:[%s223 + $0x90] sm:$0xff]
        %v245 = vld [vmem:[%s223 + $0x98] sm:$0xff]
        %v246 = vld [vmem:[%s223 + $0xa0] sm:$0xff]
        %v247 = vld [vmem:[%s223 + $0xa8] sm:$0xff]
        %v248 = vld [vmem:[%s223 + $0xb0] sm:$0xff]
        %v249 = vld [vmem:[%s223 + $0xb8] sm:$0xff]
        %v250 = vld [vmem:[%s223 + $0xc0] sm:$0xff]
        %v251 = vld [vmem:[%s223 + $0xc8] sm:$0xff]
        %v252 = vld [vmem:[%s223 + $0xd0] sm:$0xff]
        %v253 = vld [vmem:[%s223 + $0xd8] sm:$0xff]
        %v254 = vld [vmem:[%s223 + $0xe0] sm:$0xff]
        %v255 = vld [vmem:[%s223 + $0xe8] sm:$0xff]
        %v256 = vld [vmem:[%s223 + $0xf0] sm:$0xff]
        %v257 = vld [vmem:[%s223 + $0xf8] sm:$0xff]
        %v258 = vld [vmem:[%s1] sm:$0xf]
        %v259 = vld [vmem:[%s2] sm:$0x1]
        %v261 = vperm.slane %v259, 0
        %vm263 = vcmask 31744
        %v265 = vsel %vm263, %v226, 0
        %v268 = vsel %vm263, %v227, 0
        %v271 = vsel %vm263, %v228, 0
        %v274 = vsel %vm263, %v229, 0
        %v277 = vsel %vm263, %v230, 0
        %v280 = vsel %vm263, %v231, 0
        %v283 = vsel %vm263, %v232, 0
        %v286 = vsel %vm263, %v233, 0
        %v289 = vsel %vm263, %v234, 0
        %v292 = vsel %vm263, %v235, 0
        %v295 = vsel %vm263, %v236, 0
        %v298 = vsel %vm263, %v237, 0
        %v301 = vsel %vm263, %v238, 0
        %v304 = vsel %vm263, %v239, 0
        %v307 = vsel %vm263, %v240, 0
        %v310 = vsel %vm263, %v241, 0
        %v313 = vsel %vm263, %v242, 0
        %v316 = vsel %vm263, %v243, 0
        %v319 = vsel %vm263, %v244, 0
        %v322 = vsel %vm263, %v245, 0
        %v325 = vsel %vm263, %v246, 0
        %v328 = vsel %vm263, %v247, 0
        %v331 = vsel %vm263, %v248, 0
        %v334 = vsel %vm263, %v249, 0
        %v337 = vsel %vm263, %v250, 0
        %v340 = vsel %vm263, %v251, 0
        %v343 = vsel %vm263, %v252, 0
        %v346 = vsel %vm263, %v253, 0
        %v349 = vsel %vm263, %v254, 0
        %v352 = vsel %vm263, %v255, 0
        %v355 = vsel %vm263, %v256, 0
        %v358 = vsel %vm263, %v257, 0
        %vm360 = vcmask 1043456
        %v362 = vsel %vm360, %v258, 0
        %364 = vmatpush.msra.mxu0 0.0
        %365 = vmatpush.msra.mxu0 0.0
        %366 = vmatpush.msra.mxu0 0.0
        %367 = vmatpush.msra.mxu0 0.0
        %368 = vmatpush.msra.mxu0 0.0
        %369 = vmatpush.msra.mxu0 0.0
        %370 = vmatpush.msra.mxu0 0.0
        %371 = vmatpush.msra.mxu0 0.0
        %372 = vmatpush.msra.mxu0 0.0
        %373 = vmatpush.msra.mxu0 0.0
        %374 = vmatpush.msra.mxu0 0.0
        %375 = vmatpush.msra.mxu0 0.0
        %376 = vmatpush.msra.mxu0 0.0
        %377 = vmatpush.msra.mxu0 0.0
        %378 = vmatpush.msra.mxu0 0.0
        %379 = vmatpush.msra.mxu0 %v362
        %380 = vmatmul.f32.gmra.mxu0 %v265
        %v381 = vpop.f32.mrf.mxu0
        %v382 = vadd.f32 %v261, %v381
        %383 = vmatmul.f32.gmra.mxu0 %v268
        %v384 = vpop.f32.mrf.mxu0
        %v385 = vadd.f32 %v261, %v384
        %386 = vmatmul.f32.gmra.mxu0 %v271
        %v387 = vpop.f32.mrf.mxu0
        %v388 = vadd.f32 %v261, %v387
        %389 = vmatmul.f32.gmra.mxu0 %v274
        %v390 = vpop.f32.mrf.mxu0
        %v391 = vadd.f32 %v261, %v390
        %392 = vmatmul.f32.gmra.mxu0 %v277
        %v393 = vpop.f32.mrf.mxu0
        %v394 = vadd.f32 %v261, %v393
        %395 = vmatmul.f32.gmra.mxu0 %v280
        %v396 = vpop.f32.mrf.mxu0
        %v397 = vadd.f32 %v261, %v396
        %398 = vmatmul.f32.gmra.mxu0 %v283
        %v399 = vpop.f32.mrf.mxu0
        %v400 = vadd.f32 %v261, %v399
        %401 = vmatmul.f32.gmra.mxu0 %v286
        %v402 = vpop.f32.mrf.mxu0
        %v403 = vadd.f32 %v261, %v402
        %404 = vmatmul.f32.gmra.mxu0 %v289
        %v405 = vpop.f32.mrf.mxu0
        %v406 = vadd.f32 %v261, %v405
        %407 = vmatmul.f32.gmra.mxu0 %v292
        %v408 = vpop.f32.mrf.mxu0
        %v409 = vadd.f32 %v261, %v408
        %410 = vmatmul.f32.gmra.mxu0 %v295
        %v411 = vpop.f32.mrf.mxu0
        %v412 = vadd.f32 %v261, %v411
        %413 = vmatmul.f32.gmra.mxu0 %v298
        %v414 = vpop.f32.mrf.mxu0
        %v415 = vadd.f32 %v261, %v414
        %416 = vmatmul.f32.gmra.mxu0 %v301
        %v417 = vpop.f32.mrf.mxu0
        %v418 = vadd.f32 %v261, %v417
        %419 = vmatmul.f32.gmra.mxu0 %v304
        %v420 = vpop.f32.mrf.mxu0
        %v421 = vadd.f32 %v261, %v420
        %422 = vmatmul.f32.gmra.mxu0 %v307
        %v423 = vpop.f32.mrf.mxu0
        %v424 = vadd.f32 %v261, %v423
        %425 = vmatmul.f32.gmra.mxu0 %v310
        %v426 = vpop.f32.mrf.mxu0
        %v427 = vadd.f32 %v261, %v426
        %428 = vmatmul.f32.gmra.mxu0 %v313
        %v429 = vpop.f32.mrf.mxu0
        %v430 = vadd.f32 %v261, %v429
        %431 = vmatmul.f32.gmra.mxu0 %v316
        %v432 = vpop.f32.mrf.mxu0
        %v433 = vadd.f32 %v261, %v432
        %434 = vmatmul.f32.gmra.mxu0 %v319
        %v435 = vpop.f32.mrf.mxu0
        %v436 = vadd.f32 %v261, %v435
        %437 = vmatmul.f32.gmra.mxu0 %v322
        %v438 = vpop.f32.mrf.mxu0
        %v439 = vadd.f32 %v261, %v438
        %440 = vmatmul.f32.gmra.mxu0 %v325
        %v441 = vpop.f32.mrf.mxu0
        %v442 = vadd.f32 %v261, %v441
        %443 = vmatmul.f32.gmra.mxu0 %v328
        %v444 = vpop.f32.mrf.mxu0
        %v445 = vadd.f32 %v261, %v444
        %446 = vmatmul.f32.gmra.mxu0 %v331
        %v447 = vpop.f32.mrf.mxu0
        %v448 = vadd.f32 %v261, %v447
        %449 = vmatmul.f32.gmra.mxu0 %v334
        %v450 = vpop.f32.mrf.mxu0
        %v451 = vadd.f32 %v261, %v450
        %452 = vmatmul.f32.gmra.mxu0 %v337
        %v453 = vpop.f32.mrf.mxu0
        %v454 = vadd.f32 %v261, %v453
        %455 = vmatmul.f32.gmra.mxu0 %v340
        %v456 = vpop.f32.mrf.mxu0
        %v457 = vadd.f32 %v261, %v456
        %458 = vmatmul.f32.gmra.mxu0 %v343
        %v459 = vpop.f32.mrf.mxu0
        %v460 = vadd.f32 %v261, %v459
        %461 = vmatmul.f32.gmra.mxu0 %v346
        %v462 = vpop.f32.mrf.mxu0
        %v463 = vadd.f32 %v261, %v462
        %464 = vmatmul.f32.gmra.mxu0 %v349
        %v465 = vpop.f32.mrf.mxu0
        %v466 = vadd.f32 %v261, %v465
        %467 = vmatmul.f32.gmra.mxu0 %v352
        %v468 = vpop.f32.mrf.mxu0
        %v469 = vadd.f32 %v261, %v468
        %470 = vmatmul.f32.gmra.mxu0 %v355
        %v471 = vpop.f32.mrf.mxu0
        %v472 = vadd.f32 %v261, %v471
        %473 = vmatmul.f32.gmra.mxu0 %v358
        %v474 = vpop.f32.mrf.mxu0
        %v475 = vadd.f32 %v261, %v474
        %476 = vdwg.mxu0
        %v477 = vmax.f32 %v382, 0.0
        %v478 = vmax.f32 %v385, 0.0
        %v479 = vmax.f32 %v388, 0.0
        %v480 = vmax.f32 %v391, 0.0
        %v481 = vmax.f32 %v394, 0.0
        %v482 = vmax.f32 %v397, 0.0
        %v483 = vmax.f32 %v400, 0.0
        %v484 = vmax.f32 %v403, 0.0
        %v485 = vmax.f32 %v406, 0.0
        %v486 = vmax.f32 %v409, 0.0
        %v487 = vmax.f32 %v412, 0.0
        %v488 = vmax.f32 %v415, 0.0
        %v489 = vmax.f32 %v418, 0.0
        %v490 = vmax.f32 %v421, 0.0
        %v491 = vmax.f32 %v424, 0.0
        %v492 = vmax.f32 %v427, 0.0
        %v493 = vmax.f32 %v430, 0.0
        %v494 = vmax.f32 %v433, 0.0
        %v495 = vmax.f32 %v436, 0.0
        %v496 = vmax.f32 %v439, 0.0
        %v497 = vmax.f32 %v442, 0.0
        %v498 = vmax.f32 %v445, 0.0
        %v499 = vmax.f32 %v448, 0.0
        %v500 = vmax.f32 %v451, 0.0
        %v501 = vmax.f32 %v454, 0.0
        %v502 = vmax.f32 %v457, 0.0
        %v503 = vmax.f32 %v460, 0.0
        %v504 = vmax.f32 %v463, 0.0
        %v505 = vmax.f32 %v466, 0.0
        %v506 = vmax.f32 %v469, 0.0
        %v507 = vmax.f32 %v472, 0.0
        %v508 = vmax.f32 %v475, 0.0
        %v509 = vld [vmem:[%s3] sm:$0xff]
        %v510 = vld [vmem:[%s3 + $0x8] sm:$0xff]
        %v511 = vld [vmem:[%s3 + $0x10] sm:$0xff]
        %v512 = vld [vmem:[%s3 + $0x18] sm:$0xff]
        %v513 = vld [vmem:[%s3 + $0x20] sm:$0xff]
        %v514 = vld [vmem:[%s3 + $0x28] sm:$0xff]
        %v515 = vld [vmem:[%s3 + $0x30] sm:$0xff]
        %v516 = vld [vmem:[%s3 + $0x38] sm:$0xff]
        %v517 = vld [vmem:[%s3 + $0x40] sm:$0xff]
        %v518 = vld [vmem:[%s3 + $0x48] sm:$0xff]
        %v519 = vld [vmem:[%s3 + $0x50] sm:$0xff]
        %v520 = vld [vmem:[%s3 + $0x58] sm:$0xff]
        %v521 = vld [vmem:[%s3 + $0x60] sm:$0xff]
        %v522 = vld [vmem:[%s3 + $0x68] sm:$0xff]
        %v523 = vld [vmem:[%s3 + $0x70] sm:$0xff]
        %v524 = vld [vmem:[%s3 + $0x78] sm:$0xff]
        %v525 = vld [vmem:[%s4] sm:$0x1]
        %v527 = vperm.slane %v525, 0
        %529 = vmatpush.msra.mxu0 %v524
        %530 = vmatpush.msra.mxu0 %v523
        %531 = vmatpush.msra.mxu0 %v522
        %532 = vmatpush.msra.mxu0 %v521
        %533 = vmatpush.msra.mxu0 %v520
        %534 = vmatpush.msra.mxu0 %v519
        %535 = vmatpush.msra.mxu0 %v518
        %536 = vmatpush.msra.mxu0 %v517
        %537 = vmatpush.msra.mxu0 %v516
        %538 = vmatpush.msra.mxu0 %v515
        %539 = vmatpush.msra.mxu0 %v514
        %540 = vmatpush.msra.mxu0 %v513
        %541 = vmatpush.msra.mxu0 %v512
        %542 = vmatpush.msra.mxu0 %v511
        %543 = vmatpush.msra.mxu0 %v510
        %544 = vmatpush.msra.mxu0 %v509
        %545 = vmatmul.f32.gmra.mxu0 %v477
        %v546 = vpop.f32.mrf.mxu0
        %v547 = vadd.f32 %v527, %v546
        %548 = vmatmul.f32.gmra.mxu0 %v478
        %v549 = vpop.f32.mrf.mxu0
        %v550 = vadd.f32 %v527, %v549
        %551 = vmatmul.f32.gmra.mxu0 %v479
        %v552 = vpop.f32.mrf.mxu0
        %v553 = vadd.f32 %v527, %v552
        %554 = vmatmul.f32.gmra.mxu0 %v480
        %v555 = vpop.f32.mrf.mxu0
        %v556 = vadd.f32 %v527, %v555
        %557 = vmatmul.f32.gmra.mxu0 %v481
        %v558 = vpop.f32.mrf.mxu0
        %v559 = vadd.f32 %v527, %v558
        %560 = vmatmul.f32.gmra.mxu0 %v482
        %v561 = vpop.f32.mrf.mxu0
        %v562 = vadd.f32 %v527, %v561
        %563 = vmatmul.f32.gmra.mxu0 %v483
        %v564 = vpop.f32.mrf.mxu0
        %v565 = vadd.f32 %v527, %v564
        %566 = vmatmul.f32.gmra.mxu0 %v484
        %v567 = vpop.f32.mrf.mxu0
        %v568 = vadd.f32 %v527, %v567
        %569 = vmatmul.f32.gmra.mxu0 %v485
        %v570 = vpop.f32.mrf.mxu0
        %v571 = vadd.f32 %v527, %v570
        %572 = vmatmul.f32.gmra.mxu0 %v486
        %v573 = vpop.f32.mrf.mxu0
        %v574 = vadd.f32 %v527, %v573
        %575 = vmatmul.f32.gmra.mxu0 %v487
        %v576 = vpop.f32.mrf.mxu0
        %v577 = vadd.f32 %v527, %v576
        %578 = vmatmul.f32.gmra.mxu0 %v488
        %v579 = vpop.f32.mrf.mxu0
        %v580 = vadd.f32 %v527, %v579
        %581 = vmatmul.f32.gmra.mxu0 %v489
        %v582 = vpop.f32.mrf.mxu0
        %v583 = vadd.f32 %v527, %v582
        %584 = vmatmul.f32.gmra.mxu0 %v490
        %v585 = vpop.f32.mrf.mxu0
        %v586 = vadd.f32 %v527, %v585
        %587 = vmatmul.f32.gmra.mxu0 %v491
        %v588 = vpop.f32.mrf.mxu0
        %v589 = vadd.f32 %v527, %v588
        %590 = vmatmul.f32.gmra.mxu0 %v492
        %v591 = vpop.f32.mrf.mxu0
        %v592 = vadd.f32 %v527, %v591
        %593 = vmatmul.f32.gmra.mxu0 %v493
        %v594 = vpop.f32.mrf.mxu0
        %v595 = vadd.f32 %v527, %v594
        %596 = vmatmul.f32.gmra.mxu0 %v494
        %v597 = vpop.f32.mrf.mxu0
        %v598 = vadd.f32 %v527, %v597
        %599 = vmatmul.f32.gmra.mxu0 %v495
        %v600 = vpop.f32.mrf.mxu0
        %v601 = vadd.f32 %v527, %v600
        %602 = vmatmul.f32.gmra.mxu0 %v496
        %v603 = vpop.f32.mrf.mxu0
        %v604 = vadd.f32 %v527, %v603
        %605 = vmatmul.f32.gmra.mxu0 %v497
        %v606 = vpop.f32.mrf.mxu0
        %v607 = vadd.f32 %v527, %v606
        %608 = vmatmul.f32.gmra.mxu0 %v498
        %v609 = vpop.f32.mrf.mxu0
        %v610 = vadd.f32 %v527, %v609
        %611 = vmatmul.f32.gmra.mxu0 %v499
        %v612 = vpop.f32.mrf.mxu0
        %v613 = vadd.f32 %v527, %v612
        %614 = vmatmul.f32.gmra.mxu0 %v500
        %v615 = vpop.f32.mrf.mxu0
        %v616 = vadd.f32 %v527, %v615
        %617 = vmatmul.f32.gmra.mxu0 %v501
        %v618 = vpop.f32.mrf.mxu0
        %v619 = vadd.f32 %v527, %v618
        %620 = vmatmul.f32.gmra.mxu0 %v502
        %v621 = vpop.f32.mrf.mxu0
        %v622 = vadd.f32 %v527, %v621
        %623 = vmatmul.f32.gmra.mxu0 %v503
        %v624 = vpop.f32.mrf.mxu0
        %v625 = vadd.f32 %v527, %v624
        %626 = vmatmul.f32.gmra.mxu0 %v504
        %v627 = vpop.f32.mrf.mxu0
        %v628 = vadd.f32 %v527, %v627
        %629 = vmatmul.f32.gmra.mxu0 %v505
        %v630 = vpop.f32.mrf.mxu0
        %v631 = vadd.f32 %v527, %v630
        %632 = vmatmul.f32.gmra.mxu0 %v506
        %v633 = vpop.f32.mrf.mxu0
        %v634 = vadd.f32 %v527, %v633
        %635 = vmatmul.f32.gmra.mxu0 %v507
        %v636 = vpop.f32.mrf.mxu0
        %v637 = vadd.f32 %v527, %v636
        %638 = vmatmul.f32.gmra.mxu0 %v508
        %v639 = vpop.f32.mrf.mxu0
        %v640 = vadd.f32 %v527, %v639
        %641 = vdwg.mxu0
        %642 = vmax.xlane.f32.xlu0 %v547
        %v643 = vpop.xlane.xlu0 %642
        %644 = vmax.xlane.f32.xlu0 %v550
        %v645 = vpop.xlane.xlu0 %644
        %646 = vmax.xlane.f32.xlu0 %v553
        %v647 = vpop.xlane.xlu0 %646
        %648 = vmax.xlane.f32.xlu0 %v556
        %v649 = vpop.xlane.xlu0 %648
        %650 = vmax.xlane.f32.xlu0 %v559
        %v651 = vpop.xlane.xlu0 %650
        %652 = vmax.xlane.f32.xlu0 %v562
        %v653 = vpop.xlane.xlu0 %652
        %654 = vmax.xlane.f32.xlu0 %v565
        %v655 = vpop.xlane.xlu0 %654
        %656 = vmax.xlane.f32.xlu0 %v568
        %v657 = vpop.xlane.xlu0 %656
        %658 = vmax.xlane.f32.xlu0 %v571
        %v659 = vpop.xlane.xlu0 %658
        %660 = vmax.xlane.f32.xlu0 %v574
        %v661 = vpop.xlane.xlu0 %660
        %662 = vmax.xlane.f32.xlu0 %v577
        %v663 = vpop.xlane.xlu0 %662
        %664 = vmax.xlane.f32.xlu0 %v580
        %v665 = vpop.xlane.xlu0 %664
        %666 = vmax.xlane.f32.xlu0 %v583
        %v667 = vpop.xlane.xlu0 %666
        %668 = vmax.xlane.f32.xlu0 %v586
        %v669 = vpop.xlane.xlu0 %668
        %670 = vmax.xlane.f32.xlu0 %v589
        %v671 = vpop.xlane.xlu0 %670
        %672 = vmax.xlane.f32.xlu0 %v592
        %v673 = vpop.xlane.xlu0 %672
        %674 = vmax.xlane.f32.xlu0 %v595
        %v675 = vpop.xlane.xlu0 %674
        %676 = vmax.xlane.f32.xlu0 %v598
        %v677 = vpop.xlane.xlu0 %676
        %678 = vmax.xlane.f32.xlu0 %v601
        %v679 = vpop.xlane.xlu0 %678
        %680 = vmax.xlane.f32.xlu0 %v604
        %v681 = vpop.xlane.xlu0 %680
        %682 = vmax.xlane.f32.xlu0 %v607
        %v683 = vpop.xlane.xlu0 %682
        %684 = vmax.xlane.f32.xlu0 %v610
        %v685 = vpop.xlane.xlu0 %684
        %686 = vmax.xlane.f32.xlu0 %v613
        %v687 = vpop.xlane.xlu0 %686
        %688 = vmax.xlane.f32.xlu0 %v616
        %v689 = vpop.xlane.xlu0 %688
        %690 = vmax.xlane.f32.xlu0 %v619
        %v691 = vpop.xlane.xlu0 %690
        %692 = vmax.xlane.f32.xlu0 %v622
        %v693 = vpop.xlane.xlu0 %692
        %694 = vmax.xlane.f32.xlu0 %v625
        %v695 = vpop.xlane.xlu0 %694
        %696 = vmax.xlane.f32.xlu0 %v628
        %v697 = vpop.xlane.xlu0 %696
        %698 = vmax.xlane.f32.xlu0 %v631
        %v699 = vpop.xlane.xlu0 %698
        %700 = vmax.xlane.f32.xlu0 %v634
        %v701 = vpop.xlane.xlu0 %700
        %702 = vmax.xlane.f32.xlu0 %v637
        %v703 = vpop.xlane.xlu0 %702
        %704 = vmax.xlane.f32.xlu0 %v640
        %v705 = vpop.xlane.xlu0 %704
        %v706 = vsub.f32 %v547, %v643
        %v707 = vsub.f32 %v550, %v645
        %v708 = vsub.f32 %v553, %v647
        %v709 = vsub.f32 %v556, %v649
        %v710 = vsub.f32 %v559, %v651
        %v711 = vsub.f32 %v562, %v653
        %v712 = vsub.f32 %v565, %v655
        %v713 = vsub.f32 %v568, %v657
        %v714 = vsub.f32 %v571, %v659
        %v715 = vsub.f32 %v574, %v661
        %v716 = vsub.f32 %v577, %v663
        %v717 = vsub.f32 %v580, %v665
        %v718 = vsub.f32 %v583, %v667
        %v719 = vsub.f32 %v586, %v669
        %v720 = vsub.f32 %v589, %v671
        %v721 = vsub.f32 %v592, %v673
        %v722 = vsub.f32 %v595, %v675
        %v723 = vsub.f32 %v598, %v677
        %v724 = vsub.f32 %v601, %v679
        %v725 = vsub.f32 %v604, %v681
        %v726 = vsub.f32 %v607, %v683
        %v727 = vsub.f32 %v610, %v685
        %v728 = vsub.f32 %v613, %v687
        %v729 = vsub.f32 %v616, %v689
        %v730 = vsub.f32 %v619, %v691
        %v731 = vsub.f32 %v622, %v693
        %v732 = vsub.f32 %v625, %v695
        %v733 = vsub.f32 %v628, %v697
        %v734 = vsub.f32 %v631, %v699
        %v735 = vsub.f32 %v634, %v701
        %v736 = vsub.f32 %v637, %v703
        %v737 = vsub.f32 %v640, %v705
        %v738 = vmul.f32 %v706, 1.442695
        %v739 = vpow.pop %v738
        %v740 = vmul.f32 %v707, 1.442695
        %v741 = vpow.pop %v740
        %v742 = vmul.f32 %v708, 1.442695
        %v743 = vpow.pop %v742
        %v744 = vmul.f32 %v709, 1.442695
        %v745 = vpow.pop %v744
        %v746 = vmul.f32 %v710, 1.442695
        %v747 = vpow.pop %v746
        %v748 = vmul.f32 %v711, 1.442695
        %v749 = vpow.pop %v748
        %v750 = vmul.f32 %v712, 1.442695
        %v751 = vpow.pop %v750
        %v752 = vmul.f32 %v713, 1.442695
        %v753 = vpow.pop %v752
        %v754 = vmul.f32 %v714, 1.442695
        %v755 = vpow.pop %v754
        %v756 = vmul.f32 %v715, 1.442695
        %v757 = vpow.pop %v756
        %v758 = vmul.f32 %v716, 1.442695
        %v759 = vpow.pop %v758
        %v760 = vmul.f32 %v717, 1.442695
        %v761 = vpow.pop %v760
        %v762 = vmul.f32 %v718, 1.442695
        %v763 = vpow.pop %v762
        %v764 = vmul.f32 %v719, 1.442695
        %v765 = vpow.pop %v764
        %v766 = vmul.f32 %v720, 1.442695
        %v767 = vpow.pop %v766
        %v768 = vmul.f32 %v721, 1.442695
        %v769 = vpow.pop %v768
        %v770 = vmul.f32 %v722, 1.442695
        %v771 = vpow.pop %v770
        %v772 = vmul.f32 %v723, 1.442695
        %v773 = vpow.pop %v772
        %v774 = vmul.f32 %v724, 1.442695
        %v775 = vpow.pop %v774
        %v776 = vmul.f32 %v725, 1.442695
        %v777 = vpow.pop %v776
        %v778 = vmul.f32 %v726, 1.442695
        %v779 = vpow.pop %v778
        %v780 = vmul.f32 %v727, 1.442695
        %v781 = vpow.pop %v780
        %v782 = vmul.f32 %v728, 1.442695
        %v783 = vpow.pop %v782
        %v784 = vmul.f32 %v729, 1.442695
        %v785 = vpow.pop %v784
        %v786 = vmul.f32 %v730, 1.442695
        %v787 = vpow.pop %v786
        %v788 = vmul.f32 %v731, 1.442695
        %v789 = vpow.pop %v788
        %v790 = vmul.f32 %v732, 1.442695
        %v791 = vpow.pop %v790
        %v792 = vmul.f32 %v733, 1.442695
        %v793 = vpow.pop %v792
        %v794 = vmul.f32 %v734, 1.442695
        %v795 = vpow.pop %v794
        %v796 = vmul.f32 %v735, 1.442695
        %v797 = vpow.pop %v796
        %v798 = vmul.f32 %v736, 1.442695
        %v799 = vpow.pop %v798
        %v800 = vmul.f32 %v737, 1.442695
        %v801 = vpow.pop %v800
        %802 = vadd.xlane.f32.xlu0 %v739
        %v803 = vpop.xlane.xlu0 %802
        %804 = vadd.xlane.f32.xlu0 %v741
        %v805 = vpop.xlane.xlu0 %804
        %806 = vadd.xlane.f32.xlu0 %v743
        %v807 = vpop.xlane.xlu0 %806
        %808 = vadd.xlane.f32.xlu0 %v745
        %v809 = vpop.xlane.xlu0 %808
        %810 = vadd.xlane.f32.xlu0 %v747
        %v811 = vpop.xlane.xlu0 %810
        %812 = vadd.xlane.f32.xlu0 %v749
        %v813 = vpop.xlane.xlu0 %812
        %814 = vadd.xlane.f32.xlu0 %v751
        %v815 = vpop.xlane.xlu0 %814
        %816 = vadd.xlane.f32.xlu0 %v753
        %v817 = vpop.xlane.xlu0 %816
        %818 = vadd.xlane.f32.xlu0 %v755
        %v819 = vpop.xlane.xlu0 %818
        %820 = vadd.xlane.f32.xlu0 %v757
        %v821 = vpop.xlane.xlu0 %820
        %822 = vadd.xlane.f32.xlu0 %v759
        %v823 = vpop.xlane.xlu0 %822
        %824 = vadd.xlane.f32.xlu0 %v761
        %v825 = vpop.xlane.xlu0 %824
        %826 = vadd.xlane.f32.xlu0 %v763
        %v827 = vpop.xlane.xlu0 %826
        %828 = vadd.xlane.f32.xlu0 %v765
        %v829 = vpop.xlane.xlu0 %828
        %830 = vadd.xlane.f32.xlu0 %v767
        %v831 = vpop.xlane.xlu0 %830
        %832 = vadd.xlane.f32.xlu0 %v769
        %v833 = vpop.xlane.xlu0 %832
        %834 = vadd.xlane.f32.xlu0 %v771
        %v835 = vpop.xlane.xlu0 %834
        %836 = vadd.xlane.f32.xlu0 %v773
        %v837 = vpop.xlane.xlu0 %836
        %838 = vadd.xlane.f32.xlu0 %v775
        %v839 = vpop.xlane.xlu0 %838
        %840 = vadd.xlane.f32.xlu0 %v777
        %v841 = vpop.xlane.xlu0 %840
        %842 = vadd.xlane.f32.xlu0 %v779
        %v843 = vpop.xlane.xlu0 %842
        %844 = vadd.xlane.f32.xlu0 %v781
        %v845 = vpop.xlane.xlu0 %844
        %846 = vadd.xlane.f32.xlu0 %v783
        %v847 = vpop.xlane.xlu0 %846
        %848 = vadd.xlane.f32.xlu0 %v785
        %v849 = vpop.xlane.xlu0 %848
        %850 = vadd.xlane.f32.xlu0 %v787
        %v851 = vpop.xlane.xlu0 %850
        %852 = vadd.xlane.f32.xlu0 %v789
        %v853 = vpop.xlane.xlu0 %852
        %854 = vadd.xlane.f32.xlu0 %v791
        %v855 = vpop.xlane.xlu0 %854
        %856 = vadd.xlane.f32.xlu0 %v793
        %v857 = vpop.xlane.xlu0 %856
        %858 = vadd.xlane.f32.xlu0 %v795
        %v859 = vpop.xlane.xlu0 %858
        %860 = vadd.xlane.f32.xlu0 %v797
        %v861 = vpop.xlane.xlu0 %860
        %862 = vadd.xlane.f32.xlu0 %v799
        %v863 = vpop.xlane.xlu0 %862
        %864 = vadd.xlane.f32.xlu0 %v801
        %v865 = vpop.xlane.xlu0 %864
        %v866 = vrcp.pop %v803
        %v867 = vrcp.pop %v805
        %v868 = vrcp.pop %v807
        %v869 = vrcp.pop %v809
        %v870 = vrcp.pop %v811
        %v871 = vrcp.pop %v813
        %v872 = vrcp.pop %v815
        %v873 = vrcp.pop %v817
        %v874 = vrcp.pop %v819
        %v875 = vrcp.pop %v821
        %v876 = vrcp.pop %v823
        %v877 = vrcp.pop %v825
        %v878 = vrcp.pop %v827
        %v879 = vrcp.pop %v829
        %v880 = vrcp.pop %v831
        %v881 = vrcp.pop %v833
        %v882 = vrcp.pop %v835
        %v883 = vrcp.pop %v837
        %v884 = vrcp.pop %v839
        %v885 = vrcp.pop %v841
        %v886 = vrcp.pop %v843
        %v887 = vrcp.pop %v845
        %v888 = vrcp.pop %v847
        %v889 = vrcp.pop %v849
        %v890 = vrcp.pop %v851
        %v891 = vrcp.pop %v853
        %v892 = vrcp.pop %v855
        %v893 = vrcp.pop %v857
        %v894 = vrcp.pop %v859
        %v895 = vrcp.pop %v861
        %v896 = vrcp.pop %v863
        %v897 = vrcp.pop %v865
        %v898 = vmul.f32 %v803, %v866
        %v899 = vmul.f32 %v805, %v867
        %v900 = vmul.f32 %v807, %v868
        %v901 = vmul.f32 %v809, %v869
        %v902 = vmul.f32 %v811, %v870
        %v903 = vmul.f32 %v813, %v871
        %v904 = vmul.f32 %v815, %v872
        %v905 = vmul.f32 %v817, %v873
        %v906 = vmul.f32 %v819, %v874
        %v907 = vmul.f32 %v821, %v875
        %v908 = vmul.f32 %v823, %v876
        %v909 = vmul.f32 %v825, %v877
        %v910 = vmul.f32 %v827, %v878
        %v911 = vmul.f32 %v829, %v879
        %v912 = vmul.f32 %v831, %v880
        %v913 = vmul.f32 %v833, %v881
        %v914 = vmul.f32 %v835, %v882
        %v915 = vmul.f32 %v837, %v883
        %v916 = vmul.f32 %v839, %v884
        %v917 = vmul.f32 %v841, %v885
        %v918 = vmul.f32 %v843, %v886
        %v919 = vmul.f32 %v845, %v887
        %v920 = vmul.f32 %v847, %v888
        %v921 = vmul.f32 %v849, %v889
        %v922 = vmul.f32 %v851, %v890
        %v923 = vmul.f32 %v853, %v891
        %v924 = vmul.f32 %v855, %v892
        %v925 = vmul.f32 %v857, %v893
        %v926 = vmul.f32 %v859, %v894
        %v927 = vmul.f32 %v861, %v895
        %v928 = vmul.f32 %v863, %v896
        %v929 = vmul.f32 %v865, %v897
        %v930 = vsub.f32 2.0, %v898
        %v931 = vsub.f32 2.0, %v899
        %v932 = vsub.f32 2.0, %v900
        %v933 = vsub.f32 2.0, %v901
        %v934 = vsub.f32 2.0, %v902
        %v935 = vsub.f32 2.0, %v903
        %v936 = vsub.f32 2.0, %v904
        %v937 = vsub.f32 2.0, %v905
        %v938 = vsub.f32 2.0, %v906
        %v939 = vsub.f32 2.0, %v907
        %v940 = vsub.f32 2.0, %v908
        %v941 = vsub.f32 2.0, %v909
        %v942 = vsub.f32 2.0, %v910
        %v943 = vsub.f32 2.0, %v911
        %v944 = vsub.f32 2.0, %v912
        %v945 = vsub.f32 2.0, %v913
        %v946 = vsub.f32 2.0, %v914
        %v947 = vsub.f32 2.0, %v915
        %v948 = vsub.f32 2.0, %v916
        %v949 = vsub.f32 2.0, %v917
        %v950 = vsub.f32 2.0, %v918
        %v951 = vsub.f32 2.0, %v919
        %v952 = vsub.f32 2.0, %v920
        %v953 = vsub.f32 2.0, %v921
        %v954 = vsub.f32 2.0, %v922
        %v955 = vsub.f32 2.0, %v923
        %v956 = vsub.f32 2.0, %v924
        %v957 = vsub.f32 2.0, %v925
        %v958 = vsub.f32 2.0, %v926
        %v959 = vsub.f32 2.0, %v927
        %v960 = vsub.f32 2.0, %v928
        %v961 = vsub.f32 2.0, %v929
        %v962 = vmul.f32 %v866, %v930
        %v963 = vmul.f32 %v867, %v931
        %v964 = vmul.f32 %v868, %v932
        %v965 = vmul.f32 %v869, %v933
        %v966 = vmul.f32 %v870, %v934
        %v967 = vmul.f32 %v871, %v935
        %v968 = vmul.f32 %v872, %v936
        %v969 = vmul.f32 %v873, %v937
        %v970 = vmul.f32 %v874, %v938
        %v971 = vmul.f32 %v875, %v939
        %v972 = vmul.f32 %v876, %v940
        %v973 = vmul.f32 %v877, %v941
        %v974 = vmul.f32 %v878, %v942
        %v975 = vmul.f32 %v879, %v943
        %v976 = vmul.f32 %v880, %v944
        %v977 = vmul.f32 %v881, %v945
        %v978 = vmul.f32 %v882, %v946
        %v979 = vmul.f32 %v883, %v947
        %v980 = vmul.f32 %v884, %v948
        %v981 = vmul.f32 %v885, %v949
        %v982 = vmul.f32 %v886, %v950
        %v983 = vmul.f32 %v887, %v951
        %v984 = vmul.f32 %v888, %v952
        %v985 = vmul.f32 %v889, %v953
        %v986 = vmul.f32 %v890, %v954
        %v987 = vmul.f32 %v891, %v955
        %v988 = vmul.f32 %v892, %v956
        %v989 = vmul.f32 %v893, %v957
        %v990 = vmul.f32 %v894, %v958
        %v991 = vmul.f32 %v895, %v959
        %v992 = vmul.f32 %v896, %v960
        %v993 = vmul.f32 %v897, %v961
        %v994 = vmul.f32 %v739, %v962
        %v995 = vmul.f32 %v741, %v963
        %v996 = vmul.f32 %v743, %v964
        %v997 = vmul.f32 %v745, %v965
        %v998 = vmul.f32 %v747, %v966
        %v999 = vmul.f32 %v749, %v967
        %v1000 = vmul.f32 %v751, %v968
        %v1001 = vmul.f32 %v753, %v969
        %v1002 = vmul.f32 %v755, %v970
        %v1003 = vmul.f32 %v757, %v971
        %v1004 = vmul.f32 %v759, %v972
        %v1005 = vmul.f32 %v761, %v973
        %v1006 = vmul.f32 %v763, %v974
        %v1007 = vmul.f32 %v765, %v975
        %v1008 = vmul.f32 %v767, %v976
        %v1009 = vmul.f32 %v769, %v977
        %v1010 = vmul.f32 %v771, %v978
        %v1011 = vmul.f32 %v773, %v979
        %v1012 = vmul.f32 %v775, %v980
        %v1013 = vmul.f32 %v777, %v981
        %v1014 = vmul.f32 %v779, %v982
        %v1015 = vmul.f32 %v781, %v983
        %v1016 = vmul.f32 %v783, %v984
        %v1017 = vmul.f32 %v785, %v985
        %v1018 = vmul.f32 %v787, %v986
        %v1019 = vmul.f32 %v789, %v987
        %v1020 = vmul.f32 %v791, %v988
        %v1021 = vmul.f32 %v793, %v989
        %v1022 = vmul.f32 %v795, %v990
        %v1023 = vmul.f32 %v797, %v991
        %v1024 = vmul.f32 %v799, %v992
        %v1025 = vmul.f32 %v801, %v993
        %1026 = vst [vmem:[%s218] sm:$0xff] %v994
        %1027 = vst [vmem:[%s218 + $0x8] sm:$0xff] %v995
        %1028 = vst [vmem:[%s218 + $0x10] sm:$0xff] %v996
        %1029 = vst [vmem:[%s218 + $0x18] sm:$0xff] %v997
        %1030 = vst [vmem:[%s218 + $0x20] sm:$0xff] %v998
        %1031 = vst [vmem:[%s218 + $0x28] sm:$0xff] %v999
        %1032 = vst [vmem:[%s218 + $0x30] sm:$0xff] %v1000
        %1033 = vst [vmem:[%s218 + $0x38] sm:$0xff] %v1001
        %1034 = vst [vmem:[%s218 + $0x40] sm:$0xff] %v1002
        %1035 = vst [vmem:[%s218 + $0x48] sm:$0xff] %v1003
        %1036 = vst [vmem:[%s218 + $0x50] sm:$0xff] %v1004
        %1037 = vst [vmem:[%s218 + $0x58] sm:$0xff] %v1005
        %1038 = vst [vmem:[%s218 + $0x60] sm:$0xff] %v1006
        %1039 = vst [vmem:[%s218 + $0x68] sm:$0xff] %v1007
        %1040 = vst [vmem:[%s218 + $0x70] sm:$0xff] %v1008
        %1041 = vst [vmem:[%s218 + $0x78] sm:$0xff] %v1009
        %1042 = vst [vmem:[%s218 + $0x80] sm:$0xff] %v1010
        %1043 = vst [vmem:[%s218 + $0x88] sm:$0xff] %v1011
        %1044 = vst [vmem:[%s218 + $0x90] sm:$0xff] %v1012
        %1045 = vst [vmem:[%s218 + $0x98] sm:$0xff] %v1013
        %1046 = vst [vmem:[%s218 + $0xa0] sm:$0xff] %v1014
        %1047 = vst [vmem:[%s218 + $0xa8] sm:$0xff] %v1015
        %1048 = vst [vmem:[%s218 + $0xb0] sm:$0xff] %v1016
        %1049 = vst [vmem:[%s218 + $0xb8] sm:$0xff] %v1017
        %1050 = vst [vmem:[%s218 + $0xc0] sm:$0xff] %v1018
        %1051 = vst [vmem:[%s218 + $0xc8] sm:$0xff] %v1019
        %1052 = vst [vmem:[%s218 + $0xd0] sm:$0xff] %v1020
        %1053 = vst [vmem:[%s218 + $0xd8] sm:$0xff] %v1021
        %1054 = vst [vmem:[%s218 + $0xe0] sm:$0xff] %v1022
        %1055 = vst [vmem:[%s218 + $0xe8] sm:$0xff] %v1023
        %1056 = vst [vmem:[%s218 + $0xf0] sm:$0xff] %v1024
        %1057 = vst [vmem:[%s218 + $0xf8] sm:$0xff] %v1025
        %s1058 = sand.u32 %s137, 1
        %s1059 = scalar_lea.sflag [#allocation3], %s1058
        %s1060 = sand.u32 %s137, 1
        %s1061 = smul.addr %s1060, 256
        %s1062 = scalar_lea.vmem [#allocation2], %s1061
        // Predicated region
        $region41: #{tpu_custom_call.1} parent=39 // pred_check
          %p1063 = pneg %p147
        $region42: #{tpu_custom_call.1} parent=39 // pred_check_branch
          %1065 = sbr.rel (%p1063) target = $region44
        $region43: #{tpu_custom_call.1} parent=39 // pred_region
          %s1066 = smul.u32 32, %s19
          %1068 = vsyncadd %s1059, 0
          %s1069 = smul.addr %s1066, 8
          %s1070 = scalar_lea.hbm %s5, %s1069
          %s1071 = sshll.u32 %s1062, 4
          %s1072 = int_to_ptr.vmem [resolvable:$true] %s1071
          %s1073 = sshll.u32 %s1070, 4
          %s1074 = int_to_ptr.hbm [resolvable:$true] %s1073
          %1079 = dma.vmem_to_hbm [thread:$0]  %s1072, 4096, %s1074, %s1059, 128, 128, 8
        $region44: #{tpu_custom_call.1} parent=39 // pred_fallthru
          _
      $region40: #{tpu_custom_call.1} parent=5 // pred_fallthru
        _
      %p1080 = scmp.le.s32.totalorder 2, %s14
      // Predicated region
      $region45: #{tpu_custom_call.1} parent=5 // pred_check
        %p1081 = pneg %p1080
      $region46: #{tpu_custom_call.1} parent=5 // pred_check_branch
        %1083 = sbr.rel (%p1081) target = $region48
      $region47: #{tpu_custom_call.1} parent=5 // pred_region
        %s1084 = ssub.s32 %s14, 2
        // Predicated region
        $region49: #{tpu_custom_call.1} parent=47 // pred_check
          %p1085 = pneg %p153
        $region50: #{tpu_custom_call.1} parent=47 // pred_check_branch
          %1087 = sbr.rel (%p1085) target = $region52
        $region51: #{tpu_custom_call.1} parent=47 // pred_region
          %s1088 = sand.u32 %s138, 1
          %s1089 = scalar_lea.sflag [#allocation3], %s1088
          %s1090 = sand.u32 %s138, 1
          %s1091 = smul.addr %s1090, 256
          %s1092 = scalar_lea.vmem [#allocation2], %s1091
          %1094 = dma.done %s1089, 4096
        $region52: #{tpu_custom_call.1} parent=47 // pred_fallthru
          _
      $region48: #{tpu_custom_call.1} parent=5 // pred_fallthru
        _
    $region6: #{tpu_custom_call.1} parent=1 // loop_footer
      %s18 = sadd.s32 1, %s14
    $region7: #{tpu_custom_call.1} parent=1 // loop_footer_branch
      %13 = sbr.rel target = $region3
    $region8: #{tpu_custom_call.1} parent=1 // loop_exit
      _
    %1095 = vsyncpa [#allocation3], 1
    %s1096 = scalar_lea.sflag [#allocation3], 1
    %1097 = vsyncpa %s1096, 1

</llo_original>
